<compile_context>
chip_gen: v6e
topology: v6e:2x2x1
jax: 0.10.0
libtpu: 0.0.40
codegen_flags: <defaults>
</compile_context>

<pallas_src>
import jax
import jax.numpy as jnp
from jax.experimental import pallas as pl
from jax.experimental.pallas import tpu as pltpu


# ----------------------------------------------------------------------------
# Pallas kernel 1: GAL pairwise distances + in-VMEM min reductions
# ----------------------------------------------------------------------------
def _gal_dist_min_kernel(srcT_ref, tgt_ref, rowmin_ref, colmin_ref):
    x = srcT_ref[0]                                  # (tN, 3)  src points (rows)
    y = tgt_ref[0]                                   # (3,  M)  tgt points (cols)
    xx = jnp.sum(x * x, axis=1, keepdims=True)       # (tN, 1)  -- no transpose needed
    yy = jnp.sum(y * y, axis=0, keepdims=True)       # (1,  M)
    inner = jax.lax.dot_general(                     # (tN, M) = x @ y  (canonical MXU)
        x, y, (((1,), (0,)), ((), ())),
        preferred_element_type=jnp.float32)
    d = (xx + yy) - 2.0 * inner                      # squared distances
    # per-src-point min over targets (complete: M is un-tiled)
    rowmin_ref[0] = jnp.min(d, axis=1, keepdims=True)        # (tN, 1)
    # per-target partial min over this N tile (finished in glue)
    colmin_ref[0, 0] = jnp.min(d, axis=0, keepdims=True)     # (1, M)


def _huber(x, alpha):
    # TODO(synk): exact GlobalAlignLoss / huber_loss definitions are not in the
    # provided spec; this is the standard RIENet formulation (with clamp at 0
    # to guard against small negative squared distances from cancellation).
    x = jnp.maximum(x, 0.0)
    return jnp.where(x > alpha,
                     alpha * (jnp.sqrt(x + 1e-10) - 0.5 * alpha),
                     0.5 * x)


def global_align_loss(src_transformed, tgt, alpha, tile_n=128):
    """GlobalAlignLoss(src_transformed^T, tgt^T, alpha); inputs are (B,3,N)/(B,3,M)."""
    src_transformed = src_transformed.astype(jnp.float32)
    tgt = tgt.astype(jnp.float32)
    B, _, N = src_transformed.shape
    M = tgt.shape[2]

    # Re-layout LHS in the wrapper (avoids in-kernel relayout / transpose).
    srcT = jnp.swapaxes(src_transformed, 1, 2)       # (B, N, 3)

    if N % tile_n != 0:
        tile_n = N                                   # fall back to one full-N block
    nT = N // tile_n

    rowmin, colmin_part = pl.pallas_call(
        _gal_dist_min_kernel,
        out_shape=(jax.ShapeDtypeStruct((B, N, 1), jnp.float32),
                   jax.ShapeDtypeStruct((B, nT, 1, M), jnp.float32)),
        grid=(B, nT),
        in_specs=[pl.BlockSpec((1, tile_n, 3), lambda b, i: (b, i, 0)),
                  pl.BlockSpec((1, 3, M), lambda b, i: (b, 0, 0))],
        out_specs=(pl.BlockSpec((1, tile_n, 1), lambda b, i: (b, i, 0)),
                   pl.BlockSpec((1, 1, 1, M), lambda b, i: (b, i, 0, 0))),
        compiler_params=pltpu.CompilerParams(
            dimension_semantics=("parallel", "parallel"),
            vmem_limit_bytes=64 * 1024 * 1024),
    )(srcT, tgt)

    per_src_min = rowmin[:, :, 0]                             # (B, N)
    per_tgt_min = jnp.min(colmin_part[:, :, 0, :], axis=1)    # (B, M)
    loss_1 = jnp.sum(_huber(per_src_min, alpha))
    loss_2 = jnp.sum(_huber(per_tgt_min, alpha))
    return loss_1 + loss_2


# ----------------------------------------------------------------------------
# Pallas kernel 2: keypoint transform + MSE sums (per batch element)
# ----------------------------------------------------------------------------
def _keypoint_loss_kernel(r_ref, t_ref, skp_ref, tkp_ref, sknn_ref, tknn_ref,
                          kp_ref, knn_ref):
    R = r_ref[0]                                     # (3, 3)
    t = t_ref[0]                                     # (3, 1)
    skp = skp_ref[0]                                 # (3, K)
    transformed = jnp.dot(R, skp, preferred_element_type=jnp.float32) + t
    dkp = transformed - tkp_ref[0]                   # (3, K)
    kp_ref[0] = jnp.sum(jnp.sum(dkp * dkp, axis=1, keepdims=True),
                        axis=0, keepdims=True)       # (1, 1)
    dknn = sknn_ref[0] - tknn_ref[0]                 # (3, K*k)
    knn_ref[0] = jnp.sum(jnp.sum(dknn * dknn, axis=1, keepdims=True),
                         axis=0, keepdims=True)      # (1, 1)


def keypoint_knn_sqerr_sums(rotation_ab, translation_ab, src_keypoints,
                            tgt_keypoints, src_keypoints_knn, tgt_keypoints_knn):
    B, _, K = src_keypoints.shape
    kk = src_keypoints_knn.shape[-1]
    rot = rotation_ab.astype(jnp.float32)
    t = translation_ab.astype(jnp.float32).reshape(B, 3, 1)
    skp = src_keypoints.astype(jnp.float32)
    tkp = tgt_keypoints.astype(jnp.float32)
    sknn = src_keypoints_knn.astype(jnp.float32).reshape(B, 3, K * kk)
    tknn = tgt_keypoints_knn.astype(jnp.float32).reshape(B, 3, K * kk)

    kp_sum, knn_sum = pl.pallas_call(
        _keypoint_loss_kernel,
        out_shape=(jax.ShapeDtypeStruct((B, 1, 1), jnp.float32),
                   jax.ShapeDtypeStruct((B, 1, 1), jnp.float32)),
        grid=(B,),
        in_specs=[pl.BlockSpec((1, 3, 3), lambda b: (b, 0, 0)),
                  pl.BlockSpec((1, 3, 1), lambda b: (b, 0, 0)),
                  pl.BlockSpec((1, 3, K), lambda b: (b, 0, 0)),
                  pl.BlockSpec((1, 3, K), lambda b: (b, 0, 0)),
                  pl.BlockSpec((1, 3, K * kk), lambda b: (b, 0, 0)),
                  pl.BlockSpec((1, 3, K * kk), lambda b: (b, 0, 0))],
        out_specs=(pl.BlockSpec((1, 1, 1), lambda b: (b, 0, 0)),
                   pl.BlockSpec((1, 1, 1), lambda b: (b, 0, 0))),
        compiler_params=pltpu.CompilerParams(
            dimension_semantics=("parallel",)),
    )(rot, t, skp, tkp, sknn, tknn)
    return kp_sum[:, 0, 0], knn_sum[:, 0, 0]         # (B,), (B,)


# ----------------------------------------------------------------------------
# LossFunction_kitti.forward
# ----------------------------------------------------------------------------
def loss_function_kitti_forward(src_keypoints, tgt_keypoints, rotation_ab,
                                translation_ab, src_keypoints_knn,
                                tgt_keypoints_knn, k, src_transformed, tgt,
                                loss_margin=0.01):
    del k  # number of neighbors is taken from the tensor shapes (as in PyTorch)
    B = src_keypoints.shape[0]
    kk = src_keypoints_knn.shape[-1]

    # --- global alignment loss (Pallas kernel 1, fused dist + min) ---
    global_alignment_loss = global_align_loss(src_transformed, tgt, loss_margin)

    # --- keypoint + knn consensus losses (Pallas kernel 2) ---
    kp_sum, knn_sum = keypoint_knn_sqerr_sums(
        rotation_ab, translation_ab, src_keypoints, tgt_keypoints,
        src_keypoints_knn, tgt_keypoints_knn)
    # MSE(reduction='none').sum(1).sum(1).mean() == total_sq_err / B   (B,3,K)
    keypoints_loss = jnp.sum(kp_sum) / B
    # (B,3,K,k): .sum(1).sum(1) -> (B,k); .mean() == total_sq_err / (B*k)
    knn_consensus_loss = jnp.sum(knn_sum) / (B * kk)
    neighborhood_consensus_loss = knn_consensus_loss + keypoints_loss

    return neighborhood_consensus_loss, global_alignment_loss


# ----------------------------------------------------------------------------
if __name__ == "__main__":
    B = 2
    N, M = 256, 128          # point counts (lane / sublane aligned)
    K = 64                   # num keypoints
    k = 8                    # knn neighbors
    loss_margin = 0.01

    key = jax.random.PRNGKey(0)
    ks = jax.random.split(key, 8)

    src_keypoints = jax.random.normal(ks[0], (B, 3, K), jnp.float32)
    tgt_keypoints = jax.random.normal(ks[1], (B, 3, K), jnp.float32)

    # deterministic proper rotations from QR (fix det sign)
    A = jax.random.normal(ks[2], (B, 3, 3), jnp.float32)
    Q, _ = jnp.linalg.qr(A)
    det = jnp.linalg.det(Q)
    fix = jnp.stack([jnp.ones_like(det), jnp.ones_like(det), det], axis=-1)
    rotation_ab = Q * fix[:, None, :]
    translation_ab = 0.1 * jax.random.normal(ks[3], (B, 3), jnp.float32)

    src_keypoints_knn = jax.random.normal(ks[4], (B, 3, K, k), jnp.float32)
    tgt_keypoints_knn = jax.random.normal(ks[5], (B, 3, K, k), jnp.float32)
    src_transformed = jax.random.normal(ks[6], (B, 3, N), jnp.float32)
    tgt = jax.random.normal(ks[7], (B, 3, M), jnp.float32)

    ncl, gal = loss_function_kitti_forward(
        src_keypoints, tgt_keypoints, rotation_ab, translation_ab,
        src_keypoints_knn, tgt_keypoints_knn, k, src_transformed, tgt,
        loss_margin=loss_margin)
    jax.block_until_ready((ncl, gal))
    print("KERNEL_OK")
</pallas_src>

<mosaic_0001>
module attributes {stable_mosaic.version = 11 : i64} {
  func.func @_gal_dist_min_kernel(%arg0: i32, %arg1: i32, %arg2: memref<1x128x3xf32, #tpu.memory_space<vmem>>, %arg3: memref<1x3x128xf32, #tpu.memory_space<vmem>>, %arg4: memref<1x128x1xf32, #tpu.memory_space<vmem>>, %arg5: memref<1x1x1x128xf32, #tpu.memory_space<vmem>>) attributes {dimension_semantics = [#tpu.dimension_semantics<parallel>, #tpu.dimension_semantics<parallel>], iteration_bounds = array<i64: 2, 2>, scalar_prefetch = 0 : i64, scratch_operands = 0 : i64, tpu.core_type = #tpu.core_type<tc>, window_params = [{transform_indices = @transform_0, window_bounds = array<i64: 1, 128, 3>}, {transform_indices = @transform_1, window_bounds = array<i64: 1, 3, 128>}, {transform_indices = @transform_2, window_bounds = array<i64: 1, 128, 1>}, {transform_indices = @transform_3, window_bounds = array<i64: 1, 1, 1, 128>}]} {
    %c0 = arith.constant 0 : index
    %c0_0 = arith.constant 0 : index
    %c0_1 = arith.constant 0 : index
    %0 = vector.load %arg2[%c0, %c0_0, %c0_1] : memref<1x128x3xf32, #tpu.memory_space<vmem>>, vector<1x128x3xf32>
    %1 = vector.shape_cast %0 : vector<1x128x3xf32> to vector<128x3xf32>
    %c0_2 = arith.constant 0 : index
    %c0_3 = arith.constant 0 : index
    %c0_4 = arith.constant 0 : index
    %2 = vector.load %arg3[%c0_2, %c0_3, %c0_4] : memref<1x3x128xf32, #tpu.memory_space<vmem>>, vector<1x3x128xf32>
    %3 = vector.shape_cast %2 : vector<1x3x128xf32> to vector<3x128xf32>
    %4 = arith.mulf %1, %1 : vector<128x3xf32>
    %cst = arith.constant dense<0.000000e+00> : vector<128xf32>
    %5 = vector.multi_reduction <add>, %4, %cst [1] : vector<128x3xf32> to vector<128xf32>
    %6 = vector.shape_cast %5 : vector<128xf32> to vector<128x1xf32>
    %7 = arith.mulf %3, %3 : vector<3x128xf32>
    %cst_5 = arith.constant dense<0.000000e+00> : vector<128xf32>
    %8 = vector.multi_reduction <add>, %7, %cst_5 [0] : vector<3x128xf32> to vector<128xf32>
    %9 = vector.shape_cast %8 : vector<128xf32> to vector<1x128xf32>
    %cst_6 = arith.constant dense<0.000000e+00> : vector<128x128xf32>
    %10 = tpu.matmul %1, %3, %cst_6 {dimension_numbers = #tpu.dot_dimension_numbers<[1], [0], [0], [1], [0, 0, 1, 1], [], []>} : vector<128x3xf32>, vector<3x128xf32>, vector<128x128xf32> -> vector<128x128xf32>
    %11 = vector.broadcast %6 : vector<128x1xf32> to vector<128x128xf32>
    %12 = vector.broadcast %9 : vector<1x128xf32> to vector<128x128xf32>
    %13 = arith.addf %11, %12 : vector<128x128xf32>
    %cst_7 = arith.constant 2.000000e+00 : f32
    %14 = vector.broadcast %cst_7 : f32 to vector<128x128xf32>
    %15 = arith.mulf %14, %10 : vector<128x128xf32>
    %16 = arith.subf %13, %15 : vector<128x128xf32>
    %cst_8 = arith.constant dense<0x7F800000> : vector<128xf32>
    %17 = vector.multi_reduction <minimumf>, %16, %cst_8 [1] : vector<128x128xf32> to vector<128xf32>
    %18 = vector.shape_cast %17 : vector<128xf32> to vector<128x1xf32>
    %c0_9 = arith.constant 0 : index
    %c0_10 = arith.constant 0 : index
    %c0_11 = arith.constant 0 : index
    %19 = vector.load %arg4[%c0_9, %c0_10, %c0_11] : memref<1x128x1xf32, #tpu.memory_space<vmem>>, vector<1x128x1xf32>
    %20 = vector.shape_cast %19 : vector<1x128x1xf32> to vector<128x1xf32>
    %21 = vector.shape_cast %18 : vector<128x1xf32> to vector<1x128x1xf32>
    tpu.vector_store %arg4[%c0_9, %c0_10, %c0_11], %21 {strides = array<i32>} : memref<1x128x1xf32, #tpu.memory_space<vmem>>, vector<1x128x1xf32>,
    %cst_12 = arith.constant dense<0x7F800000> : vector<128xf32>
    %22 = vector.multi_reduction <minimumf>, %16, %cst_12 [0] : vector<128x128xf32> to vector<128xf32>
    %23 = vector.shape_cast %22 : vector<128xf32> to vector<1x128xf32>
    %c0_13 = arith.constant 0 : index
    %c0_14 = arith.constant 0 : index
    %c0_15 = arith.constant 0 : index
    %c0_16 = arith.constant 0 : index
    %24 = vector.load %arg5[%c0_13, %c0_14, %c0_15, %c0_16] : memref<1x1x1x128xf32, #tpu.memory_space<vmem>>, vector<1x1x1x128xf32>
    %25 = vector.shape_cast %24 : vector<1x1x1x128xf32> to vector<1x128xf32>
    %26 = vector.shape_cast %23 : vector<1x128xf32> to vector<1x1x1x128xf32>
    tpu.vector_store %arg5[%c0_13, %c0_14, %c0_15, %c0_16], %26 {strides = array<i32>} : memref<1x1x1x128xf32, #tpu.memory_space<vmem>>, vector<1x1x1x128xf32>,
    return
  }
  func.func @transform_0(%arg0: i32, %arg1: i32) -> (i32, i32, i32) {
    %c0_i32 = arith.constant 0 : i32
    %c0_i32_0 = arith.constant 0 : i32
    return %arg0, %arg1, %c0_i32 : i32, i32, i32
  }
  func.func @transform_1(%arg0: i32, %arg1: i32) -> (i32, i32, i32) {
    %c0_i32 = arith.constant 0 : i32
    %c0_i32_0 = arith.constant 0 : i32
    %c0_i32_1 = arith.constant 0 : i32
    return %arg0, %c0_i32, %c0_i32_0 : i32, i32, i32
  }
  func.func @transform_2(%arg0: i32, %arg1: i32) -> (i32, i32, i32) {
    %c0_i32 = arith.constant 0 : i32
    %c0_i32_0 = arith.constant 0 : i32
    return %arg0, %arg1, %c0_i32 : i32, i32, i32
  }
  func.func @transform_3(%arg0: i32, %arg1: i32) -> (i32, i32, i32, i32) {
    %c0_i32 = arith.constant 0 : i32
    %c0_i32_0 = arith.constant 0 : i32
    %c0_i32_1 = arith.constant 0 : i32
    return %arg0, %arg1, %c0_i32, %c0_i32_0 : i32, i32, i32, i32
  }
}

</mosaic_0001>

<llo_original>
// kernel: tpu_custom_call.1
$region0: #{tpu_custom_call.1}
  #allocation0 [shape = 'u32[]', space=smem, size = 0x4, offset = 0x4, fixed_abs, tag = 'smem constant byte address 0x4 - core index']
  #allocation1 [shape = 'u32[144,128]{1,0:T(1,128)}', space=vmem, size = 0x12000, scoped, tag = 'internal scratch']
  %s0 = inlined_call_operand.vmem [shape: f32[2,256,3], index: 0, kind: input, shape index: {}]
  %s1 = inlined_call_operand.vmem [shape: f32[2,3,128], index: 1, kind: input, shape index: {}]
  %s2 = inlined_call_operand.vmem [shape: f32[2,256,1], index: 2, kind: output, shape index: {0}]
  %s3 = inlined_call_operand.hbm [shape: f32[2,2,1,128], index: 3, kind: output, shape index: {1}]
  %4 = xla_tuple %s2, %s3
  %s5 = sld [smem:[#allocation0]]
  $region49: #{tpu_custom_call.1} parent=0
    _
  %s7 = ssub.s32 1, %s5
  %s8 = scalar_select 0, %s7, %s5
  $region1: #{tpu_custom_call.1} parent=0
    #allocation2 [shape = 'u8[1024]{0}', space=vmem, size = 0x400, scoped, tag = 'output window, operand 1']
    #allocation3 [shape = 's32[2]{0}', space=sflag, size = 0x8, scoped, tag = 'scoped memory for tpu_custom_call.1']
    %9 = vsyncpa [#allocation3], 0
    %s10 = scalar_lea.sflag [#allocation3], 1
    %11 = vsyncpa %s10, 0
    loop: start=0, step=1, limit=6
    $region2: #{tpu_custom_call.1} parent=1 // loop_pre_header
      _
    $region3: #{tpu_custom_call.1} parent=1 // loop_header
      %s13 = sphi 0, %s17
      %p14 = scmp.ge.s32.totalorder %s13, 6
      %s20 = sphi 0, %s32
      %s21 = sphi 0, %s28
      %s22 = sphi 0, %s20
      %s23 = sphi 0, %s21
      %s24 = sphi 0, %s22
      %s25 = sphi 0, %s23
      %s37 = sphi 0, %s39
      %s40 = sphi 0, %s37
      %s41 = sphi 0, %s40
      %s57 = sphi 0, %s41
      %s63 = sphi 0, %s65
      %s66 = sphi 0, %s63
      %s67 = sphi 0, %s66
      %s83 = sphi 0, %s67
      %s91 = sphi 0, %s93
      %s94 = sphi 0, %s91
      %s95 = sphi 0, %s94
      %s111 = sphi 0, %s95
      %s119 = sphi 0, %s121
      %s122 = sphi 0, %s119
      %s123 = sphi 0, %s122
      %s139 = sphi 0, %s123
    $region4: #{tpu_custom_call.1} parent=1 // loop_header_branch
      %16 = sbr.rel (%p14) target = $region8
    $region5: #{tpu_custom_call.1} parent=1 // loop_body
      %s18 = ssub.s32 %s13, 1
      %s19 = ssub.s32 %s13, 2
      %s26 = sadd.s32 1, %s21
      %p27 = scmp.ge.s32.totalorder %s26, 2
      %s28 = scalar_select %p27, 0, %s26
      %s29 = sadd.s32 1, %s20
      %s30 = scalar_select %p27, %s29, %s20
      %p31 = scmp.ge.s32.totalorder %s30, 2
      %s32 = scalar_select %p31, 0, %s30
      %s33 = ssub.s32 %s20, %s32
      %s34 = ssub.s32 %s21, %s28
      %s35 = sor.u32 %s33, %s34
      %p36 = scmp.eq.s32.totalorder %s35, 0
      %s38 = sadd.s32 %s37, 1
      %s39 = scalar_select %p36, %s37, %s38
      %p42 = pneg %p36
      %p43 = scmp.eq.s32.totalorder %s13, 3
      %p44 = por %p42, %p43
      %p45 = scmp.ne.s32.totalorder %s37, %s40
      %p46 = scmp.eq.s32.totalorder %s13, 0
      %p47 = por %p45, %p46
      %p48 = scmp.ne.s32.totalorder %s37, %s40
      %p49 = scmp.eq.s32.totalorder %s18, 3
      %p50 = por %p48, %p49
      %p51 = scmp.ne.s32.totalorder %s40, %s41
      %p52 = scmp.eq.s32.totalorder %s18, 0
      %p53 = por %p51, %p52
      %p54 = scmp.ne.s32.totalorder %s40, %s41
      %p55 = scmp.eq.s32.totalorder %s19, 3
      %p56 = por %p54, %p55
      %p58 = scmp.ne.s32.totalorder %s41, %s57
      %p59 = scmp.eq.s32.totalorder %s19, 0
      %p60 = por %p58, %p59
      %s61 = ssub.s32 %s20, %s32
      %p62 = scmp.eq.s32.totalorder %s61, 0
      %s64 = sadd.s32 %s63, 1
      %s65 = scalar_select %p62, %s63, %s64
      %p68 = pneg %p62
      %p69 = scmp.eq.s32.totalorder %s13, 3
      %p70 = por %p68, %p69
      %p71 = scmp.ne.s32.totalorder %s63, %s66
      %p72 = scmp.eq.s32.totalorder %s13, 0
      %p73 = por %p71, %p72
      %p74 = scmp.ne.s32.totalorder %s63, %s66
      %p75 = scmp.eq.s32.totalorder %s18, 3
      %p76 = por %p74, %p75
      %p77 = scmp.ne.s32.totalorder %s66, %s67
      %p78 = scmp.eq.s32.totalorder %s18, 0
      %p79 = por %p77, %p78
      %p80 = scmp.ne.s32.totalorder %s66, %s67
      %p81 = scmp.eq.s32.totalorder %s19, 3
      %p82 = por %p80, %p81
      %p84 = scmp.ne.s32.totalorder %s67, %s83
      %p85 = scmp.eq.s32.totalorder %s19, 0
      %p86 = por %p84, %p85
      %s87 = ssub.s32 %s20, %s32
      %s88 = ssub.s32 %s21, %s28
      %s89 = sor.u32 %s87, %s88
      %p90 = scmp.eq.s32.totalorder %s89, 0
      %s92 = sadd.s32 %s91, 1
      %s93 = scalar_select %p90, %s91, %s92
      %p96 = pneg %p90
      %p97 = scmp.eq.s32.totalorder %s13, 3
      %p98 = por %p96, %p97
      %p99 = scmp.ne.s32.totalorder %s91, %s94
      %p100 = scmp.eq.s32.totalorder %s13, 0
      %p101 = por %p99, %p100
      %p102 = scmp.ne.s32.totalorder %s91, %s94
      %p103 = scmp.eq.s32.totalorder %s18, 3
      %p104 = por %p102, %p103
      %p105 = scmp.ne.s32.totalorder %s94, %s95
      %p106 = scmp.eq.s32.totalorder %s18, 0
      %p107 = por %p105, %p106
      %p108 = scmp.ne.s32.totalorder %s94, %s95
      %p109 = scmp.eq.s32.totalorder %s19, 3
      %p110 = por %p108, %p109
      %p112 = scmp.ne.s32.totalorder %s95, %s111
      %p113 = scmp.eq.s32.totalorder %s19, 0
      %p114 = por %p112, %p113
      %s115 = ssub.s32 %s20, %s32
      %s116 = ssub.s32 %s21, %s28
      %s117 = sor.u32 %s115, %s116
      %p118 = scmp.eq.s32.totalorder %s117, 0
      %s120 = sadd.s32 %s119, 1
      %s121 = scalar_select %p118, %s119, %s120
      %p124 = pneg %p118
      %p125 = scmp.eq.s32.totalorder %s13, 3
      %p126 = por %p124, %p125
      %p127 = scmp.ne.s32.totalorder %s119, %s122
      %p128 = scmp.eq.s32.totalorder %s13, 0
      %p129 = por %p127, %p128
      %p130 = scmp.ne.s32.totalorder %s119, %s122
      %p131 = scmp.eq.s32.totalorder %s18, 3
      %p132 = por %p130, %p131
      %p133 = scmp.ne.s32.totalorder %s122, %s123
      %p134 = scmp.eq.s32.totalorder %s18, 0
      %p135 = por %p133, %p134
      %p136 = scmp.ne.s32.totalorder %s122, %s123
      %p137 = scmp.eq.s32.totalorder %s19, 3
      %p138 = por %p136, %p137
      %p140 = scmp.ne.s32.totalorder %s123, %s139
      %p141 = scmp.eq.s32.totalorder %s19, 0
      %p142 = por %p140, %p141
      %p143 = scmp.le.s32.totalorder 1, %s13
      %p144 = scmp.lt.s32.totalorder %s13, 5
      %p145 = pnand %p143, %p144
      %p146 = pneg %p145
      // Predicated region
      $region9: #{tpu_custom_call.1} parent=5 // pred_check
        _
      $region10: #{tpu_custom_call.1} parent=5 // pred_check_branch
        %148 = sbr.rel (%p145) target = $region12
      $region11: #{tpu_custom_call.1} parent=5 // pred_region
        %s149 = ssub.s32 %s13, 1
      $region12: #{tpu_custom_call.1} parent=5 // pred_fallthru
        _
      %p150 = scmp.lt.s32.totalorder %s13, 4
      // Predicated region
      $region13: #{tpu_custom_call.1} parent=5 // pred_check
        %p151 = pneg %p150
      $region14: #{tpu_custom_call.1} parent=5 // pred_check_branch
        %153 = sbr.rel (%p151) target = $region16
      $region15: #{tpu_custom_call.1} parent=5 // pred_region
        // Predicated region
        $region17: #{tpu_custom_call.1} parent=15 // pred_check
          %p154 = pneg %p47
        $region18: #{tpu_custom_call.1} parent=15 // pred_check_branch
          %156 = sbr.rel (%p154) target = $region20
        $region19: #{tpu_custom_call.1} parent=15 // pred_region
          %s157 = smul.u32 16, %s21
          %p158 = scmp.lt.s32.totalorder %s20, 1
          %s159 = scalar_select %p158, %s20, 1
          %p160 = scmp.lt.s32.totalorder %s157, 31
          %s161 = scalar_select %p160, %s157, 31
          %s162 = smul.addr %s159, 32
          %s163 = sadd.s32 %s161, %s162
          %s164 = smul.addr %s163, 8
          %s165 = scalar_lea.vmem %s0, %s164
          %s166 = smul.u32 16, %s21
        $region20: #{tpu_custom_call.1} parent=15 // pred_fallthru
          _
        // Predicated region
        $region21: #{tpu_custom_call.1} parent=15 // pred_check
          %p167 = pneg %p73
        $region22: #{tpu_custom_call.1} parent=15 // pred_check_branch
          %169 = sbr.rel (%p167) target = $region24
        $region23: #{tpu_custom_call.1} parent=15 // pred_region
          %p170 = scmp.lt.s32.totalorder %s20, 1
          %s171 = scalar_select %p170, %s20, 1
          %s172 = smul.addr %s171, 4
          %s173 = scalar_lea.vmem %s1, %s172
        $region24: #{tpu_custom_call.1} parent=15 // pred_fallthru
          _
      $region16: #{tpu_custom_call.1} parent=5 // pred_fallthru
        _
      %p174 = scmp.le.s32.totalorder 1, %s13
      %p175 = scmp.lt.s32.totalorder %s13, 5
      %p176 = pnand %p174, %p175
      %p177 = pneg %p176
      // Predicated region
      $region25: #{tpu_custom_call.1} parent=5 // pred_check
        _
      $region26: #{tpu_custom_call.1} parent=5 // pred_check_branch
        %179 = sbr.rel (%p176) target = $region28
      $region27: #{tpu_custom_call.1} parent=5 // pred_region
        %s180 = ssub.s32 %s13, 1
        %s181 = smul.u32 16, %s23
        %p182 = scmp.lt.s32.totalorder %s22, 1
        %s183 = scalar_select %p182, %s22, 1
        %p184 = scmp.lt.s32.totalorder %s181, 31
        %s185 = scalar_select %p184, %s181, 31
        %s186 = smul.addr %s183, 32
        %s187 = sadd.s32 %s185, %s186
        %s188 = smul.addr %s187, 8
        %s189 = scalar_lea.vmem %s0, %s188
        %p190 = pneg %p53
        %p191 = pneg %p50
        %p192 = scmp.lt.s32.totalorder %s22, 1
        %s193 = scalar_select %p192, %s22, 1
        %s194 = smul.addr %s193, 4
        %s195 = scalar_lea.vmem %s1, %s194
        %p196 = pneg %p79
        %p197 = pneg %p76
        %p198 = pneg %p107
        %p199 = pneg %p104
        %s200 = smul.u32 16, %s23
        %p201 = scmp.lt.s32.totalorder %s22, 1
        %s202 = scalar_select %p201, %s22, 1
        %p203 = scmp.lt.s32.totalorder %s200, 31
        %s204 = scalar_select %p203, %s200, 31
        %s205 = smul.addr %s202, 32
        %s206 = sadd.s32 %s204, %s205
        %s207 = smul.addr %s206, 8
        %s208 = scalar_lea.vmem %s2, %s207
        %p209 = pneg %p135
        %p210 = pneg %p132
        %s211 = sand.u32 %s122, 1
        %s212 = scalar_lea.sflag [#allocation3], %s211
        %s213 = sand.u32 %s122, 1
        %s214 = scalar_lea.vmem [#allocation2], %s213
        %s215 = smul.u32 16, %s23
        %p216 = scmp.lt.s32.totalorder %s22, 1
        %s217 = scalar_select %p216, %s22, 1
        %p218 = scmp.lt.s32.totalorder %s215, 31
        %s219 = scalar_select %p218, %s215, 31
        %s220 = smul.addr %s217, 32
        %s221 = sadd.s32 %s219, %s220
        %s222 = smul.addr %s221, 8
        %s223 = scalar_lea.vmem %s0, %s222
        %s224 = smul.u32 16, %s23
        %p225 = scmp.lt.s32.totalorder %s22, 1
        %s226 = scalar_select %p225, %s22, 1
        %s227 = smul.addr %s226, 4
        %s228 = scalar_lea.vmem %s1, %s227
        %s229 = smul.u32 16, %s23
        %p230 = scmp.lt.s32.totalorder %s22, 1
        %s231 = scalar_select %p230, %s22, 1
        %p232 = scmp.lt.s32.totalorder %s229, 31
        %s233 = scalar_select %p232, %s229, 31
        %s234 = smul.addr %s231, 32
        %s235 = sadd.s32 %s233, %s234
        %s236 = smul.addr %s235, 8
        %s237 = scalar_lea.vmem %s2, %s236
        %s238 = smul.u32 16, %s23
        %v239 = vld [vmem:[%s223] sm:$0xff]
        %v240 = vld [vmem:[%s223 + $0x8] sm:$0xff]
        %v241 = vld [vmem:[%s223 + $0x10] sm:$0xff]
        %v242 = vld [vmem:[%s223 + $0x18] sm:$0xff]
        %v243 = vld [vmem:[%s223 + $0x20] sm:$0xff]
        %v244 = vld [vmem:[%s223 + $0x28] sm:$0xff]
        %v245 = vld [vmem:[%s223 + $0x30] sm:$0xff]
        %v246 = vld [vmem:[%s223 + $0x38] sm:$0xff]
        %v247 = vld [vmem:[%s223 + $0x40] sm:$0xff]
        %v248 = vld [vmem:[%s223 + $0x48] sm:$0xff]
        %v249 = vld [vmem:[%s223 + $0x50] sm:$0xff]
        %v250 = vld [vmem:[%s223 + $0x58] sm:$0xff]
        %v251 = vld [vmem:[%s223 + $0x60] sm:$0xff]
        %v252 = vld [vmem:[%s223 + $0x68] sm:$0xff]
        %v253 = vld [vmem:[%s223 + $0x70] sm:$0xff]
        %v254 = vld [vmem:[%s223 + $0x78] sm:$0xff]
        %v255 = vld [vmem:[%s228] sm:$0x7]
        %v256 = vmul.f32 %v239, %v239
        %v257 = vmul.f32 %v240, %v240
        %v258 = vmul.f32 %v241, %v241
        %v259 = vmul.f32 %v242, %v242
        %v260 = vmul.f32 %v243, %v243
        %v261 = vmul.f32 %v244, %v244
        %v262 = vmul.f32 %v245, %v245
        %v263 = vmul.f32 %v246, %v246
        %v264 = vmul.f32 %v247, %v247
        %v265 = vmul.f32 %v248, %v248
        %v266 = vmul.f32 %v249, %v249
        %v267 = vmul.f32 %v250, %v250
        %v268 = vmul.f32 %v251, %v251
        %v269 = vmul.f32 %v252, %v252
        %v270 = vmul.f32 %v253, %v253
        %v271 = vmul.f32 %v254, %v254
        %vm272 = vcmask 23552
        %v273 = vsel %vm272, %v256, 0.0
        %274 = vadd.xlane.f32.xlu0 %v273
        %v275 = vpop.xlane.xlu0 %274
        %v276 = vsel %vm272, %v257, 0.0
        %277 = vadd.xlane.f32.xlu0 %v276
        %v278 = vpop.xlane.xlu0 %277
        %v279 = vsel %vm272, %v258, 0.0
        %280 = vadd.xlane.f32.xlu0 %v279
        %v281 = vpop.xlane.xlu0 %280
        %v282 = vsel %vm272, %v259, 0.0
        %283 = vadd.xlane.f32.xlu0 %v282
        %v284 = vpop.xlane.xlu0 %283
        %v285 = vsel %vm272, %v260, 0.0
        %286 = vadd.xlane.f32.xlu0 %v285
        %v287 = vpop.xlane.xlu0 %286
        %v288 = vsel %vm272, %v261, 0.0
        %289 = vadd.xlane.f32.xlu0 %v288
        %v290 = vpop.xlane.xlu0 %289
        %v291 = vsel %vm272, %v262, 0.0
        %292 = vadd.xlane.f32.xlu0 %v291
        %v293 = vpop.xlane.xlu0 %292
        %v294 = vsel %vm272, %v263, 0.0
        %295 = vadd.xlane.f32.xlu0 %v294
        %v296 = vpop.xlane.xlu0 %295
        %v297 = vsel %vm272, %v264, 0.0
        %298 = vadd.xlane.f32.xlu0 %v297
        %v299 = vpop.xlane.xlu0 %298
        %v300 = vsel %vm272, %v265, 0.0
        %301 = vadd.xlane.f32.xlu0 %v300
        %v302 = vpop.xlane.xlu0 %301
        %v303 = vsel %vm272, %v266, 0.0
        %304 = vadd.xlane.f32.xlu0 %v303
        %v305 = vpop.xlane.xlu0 %304
        %v306 = vsel %vm272, %v267, 0.0
        %307 = vadd.xlane.f32.xlu0 %v306
        %v308 = vpop.xlane.xlu0 %307
        %v309 = vsel %vm272, %v268, 0.0
        %310 = vadd.xlane.f32.xlu0 %v309
        %v311 = vpop.xlane.xlu0 %310
        %v312 = vsel %vm272, %v269, 0.0
        %313 = vadd.xlane.f32.xlu0 %v312
        %v314 = vpop.xlane.xlu0 %313
        %v315 = vsel %vm272, %v270, 0.0
        %316 = vadd.xlane.f32.xlu0 %v315
        %v317 = vpop.xlane.xlu0 %316
        %v318 = vsel %vm272, %v271, 0.0
        %319 = vadd.xlane.f32.xlu0 %v318
        %v320 = vpop.xlane.xlu0 %319
        %v321 = vmul.f32 %v255, %v255
        %vm322 = vcmask 1042432
        %v323 = vsel %vm322, %v321, 0.0
        %v324 = vrot.slane %v323, 4
        %v325 = vadd.f32 %v323, %v324
        %v326 = vrot.slane %v325, 2
        %v327 = vadd.f32 %v325, %v326
        %v328 = vrot.slane %v327, 1
        %v329 = vadd.f32 %v327, %v328
        %v331 = vsel %vm272, %v239, 0
        %v334 = vsel %vm272, %v240, 0
        %v337 = vsel %vm272, %v241, 0
        %v340 = vsel %vm272, %v242, 0
        %v343 = vsel %vm272, %v243, 0
        %v346 = vsel %vm272, %v244, 0
        %v349 = vsel %vm272, %v245, 0
        %v352 = vsel %vm272, %v246, 0
        %v355 = vsel %vm272, %v247, 0
        %v358 = vsel %vm272, %v248, 0
        %v361 = vsel %vm272, %v249, 0
        %v364 = vsel %vm272, %v250, 0
        %v367 = vsel %vm272, %v251, 0
        %v370 = vsel %vm272, %v252, 0
        %v373 = vsel %vm272, %v253, 0
        %v376 = vsel %vm272, %v254, 0
        %v379 = vsel %vm322, %v255, 0
        %381 = vmatprep.subr.mxu0 0.0
        %382 = vmatpush1.msra.mxu0 0.0
        %383 = vmatprep.subr.mxu0 0.0
        %384 = vmatpush1.msra.mxu0 0.0
        %385 = vmatprep.subr.mxu0 0.0
        %386 = vmatpush1.msra.mxu0 0.0
        %387 = vmatprep.subr.mxu0 0.0
        %388 = vmatpush1.msra.mxu0 0.0
        %389 = vmatprep.subr.mxu0 0.0
        %390 = vmatpush1.msra.mxu0 0.0
        %391 = vmatprep.subr.mxu0 0.0
        %392 = vmatpush1.msra.mxu0 0.0
        %393 = vmatprep.subr.mxu0 0.0
        %394 = vmatpush1.msra.mxu0 0.0
        %395 = vmatprep.subr.mxu0 0.0
        %396 = vmatpush1.msra.mxu0 0.0
        %397 = vmatprep.subr.mxu0 0.0
        %398 = vmatpush1.msra.mxu0 0.0
        %399 = vmatprep.subr.mxu0 0.0
        %400 = vmatpush1.msra.mxu0 0.0
        %401 = vmatprep.subr.mxu0 0.0
        %402 = vmatpush1.msra.mxu0 0.0
        %403 = vmatprep.subr.mxu0 0.0
        %404 = vmatpush1.msra.mxu0 0.0
        %405 = vmatprep.subr.mxu0 0.0
        %406 = vmatpush1.msra.mxu0 0.0
        %407 = vmatprep.subr.mxu0 0.0
        %408 = vmatpush1.msra.mxu0 0.0
        %409 = vmatprep.subr.mxu0 0.0
        %410 = vmatpush1.msra.mxu0 0.0
        %411 = vmatprep.subr.mxu0 0.0
        %412 = vmatpush1.msra.mxu0 %v379
        %413 = vmatprep.subr.mxu0 0.0
        %414 = vmatpush2.msra.mxu0 0.0
        %415 = vmatprep.subr.mxu0 0.0
        %416 = vmatpush2.msra.mxu0 0.0
        %417 = vmatprep.subr.mxu0 0.0
        %418 = vmatpush2.msra.mxu0 0.0
        %419 = vmatprep.subr.mxu0 0.0
        %420 = vmatpush2.msra.mxu0 0.0
        %421 = vmatprep.subr.mxu0 0.0
        %422 = vmatpush2.msra.mxu0 0.0
        %423 = vmatprep.subr.mxu0 0.0
        %424 = vmatpush2.msra.mxu0 0.0
        %425 = vmatprep.subr.mxu0 0.0
        %426 = vmatpush2.msra.mxu0 0.0
        %427 = vmatprep.subr.mxu0 0.0
        %428 = vmatpush2.msra.mxu0 0.0
        %429 = vmatprep.subr.mxu0 0.0
        %430 = vmatpush2.msra.mxu0 0.0
        %431 = vmatprep.subr.mxu0 0.0
        %432 = vmatpush2.msra.mxu0 0.0
        %433 = vmatprep.subr.mxu0 0.0
        %434 = vmatpush2.msra.mxu0 0.0
        %435 = vmatprep.subr.mxu0 0.0
        %436 = vmatpush2.msra.mxu0 0.0
        %437 = vmatprep.subr.mxu0 0.0
        %438 = vmatpush2.msra.mxu0 0.0
        %439 = vmatprep.subr.mxu0 0.0
        %440 = vmatpush2.msra.mxu0 0.0
        %441 = vmatprep.subr.mxu0 0.0
        %442 = vmatpush2.msra.mxu0 0.0
        %443 = vmatprep.subr.mxu0 0.0
        %444 = vmatpush2.msra.mxu0 0.0
        %445 = vmatprep.mubr.f32.mxu0 0.0
        %446 = vmatmul.mubr.f32.gmra.mxu0 %v331
        %v447 = vpop.f32.mrf.mxu0
        %v448 = vadd.f32 0.0, %v447
        %v449 = vpop.f32.mrf.mxu0
        %450 = vmatprep.mubr.f32.mxu0 0.0
        %451 = vmatmul.mubr.f32.gmra.mxu0 %v334
        %v452 = vpop.f32.mrf.mxu0
        %v453 = vadd.f32 0.0, %v452
        %v454 = vpop.f32.mrf.mxu0
        %455 = vmatprep.mubr.f32.mxu0 0.0
        %456 = vmatmul.mubr.f32.gmra.mxu0 %v337
        %v457 = vpop.f32.mrf.mxu0
        %v458 = vadd.f32 0.0, %v457
        %v459 = vpop.f32.mrf.mxu0
        %460 = vmatprep.mubr.f32.mxu0 0.0
        %461 = vmatmul.mubr.f32.gmra.mxu0 %v340
        %v462 = vpop.f32.mrf.mxu0
        %v463 = vadd.f32 0.0, %v462
        %v464 = vpop.f32.mrf.mxu0
        %465 = vmatprep.mubr.f32.mxu0 0.0
        %466 = vmatmul.mubr.f32.gmra.mxu0 %v343
        %v467 = vpop.f32.mrf.mxu0
        %v468 = vadd.f32 0.0, %v467
        %v469 = vpop.f32.mrf.mxu0
        %470 = vmatprep.mubr.f32.mxu0 0.0
        %471 = vmatmul.mubr.f32.gmra.mxu0 %v346
        %v472 = vpop.f32.mrf.mxu0
        %v473 = vadd.f32 0.0, %v472
        %v474 = vpop.f32.mrf.mxu0
        %475 = vmatprep.mubr.f32.mxu0 0.0
        %476 = vmatmul.mubr.f32.gmra.mxu0 %v349
        %v477 = vpop.f32.mrf.mxu0
        %v478 = vadd.f32 0.0, %v477
        %v479 = vpop.f32.mrf.mxu0
        %480 = vmatprep.mubr.f32.mxu0 0.0
        %481 = vmatmul.mubr.f32.gmra.mxu0 %v352
        %v482 = vpop.f32.mrf.mxu0
        %v483 = vadd.f32 0.0, %v482
        %v484 = vpop.f32.mrf.mxu0
        %485 = vmatprep.mubr.f32.mxu0 0.0
        %486 = vmatmul.mubr.f32.gmra.mxu0 %v355
        %v487 = vpop.f32.mrf.mxu0
        %v488 = vadd.f32 0.0, %v487
        %v489 = vpop.f32.mrf.mxu0
        %490 = vmatprep.mubr.f32.mxu0 0.0
        %491 = vmatmul.mubr.f32.gmra.mxu0 %v358
        %v492 = vpop.f32.mrf.mxu0
        %v493 = vadd.f32 0.0, %v492
        %v494 = vpop.f32.mrf.mxu0
        %495 = vmatprep.mubr.f32.mxu0 0.0
        %496 = vmatmul.mubr.f32.gmra.mxu0 %v361
        %v497 = vpop.f32.mrf.mxu0
        %v498 = vadd.f32 0.0, %v497
        %v499 = vpop.f32.mrf.mxu0
        %500 = vmatprep.mubr.f32.mxu0 0.0
        %501 = vmatmul.mubr.f32.gmra.mxu0 %v364
        %v502 = vpop.f32.mrf.mxu0
        %v503 = vadd.f32 0.0, %v502
        %v504 = vpop.f32.mrf.mxu0
        %505 = vmatprep.mubr.f32.mxu0 0.0
        %506 = vmatmul.mubr.f32.gmra.mxu0 %v367
        %v507 = vpop.f32.mrf.mxu0
        %v508 = vadd.f32 0.0, %v507
        %v509 = vpop.f32.mrf.mxu0
        %510 = vmatprep.mubr.f32.mxu0 0.0
        %511 = vmatmul.mubr.f32.gmra.mxu0 %v370
        %v512 = vpop.f32.mrf.mxu0
        %v513 = vadd.f32 0.0, %v512
        %v514 = vpop.f32.mrf.mxu0
        %515 = vmatprep.mubr.f32.mxu0 0.0
        %516 = vmatmul.mubr.f32.gmra.mxu0 %v373
        %v517 = vpop.f32.mrf.mxu0
        %v518 = vadd.f32 0.0, %v517
        %v519 = vpop.f32.mrf.mxu0
        %520 = vmatprep.mubr.f32.mxu0 0.0
        %521 = vmatmul.mubr.f32.gmra.mxu0 %v376
        %v522 = vpop.f32.mrf.mxu0
        %v523 = vadd.f32 0.0, %v522
        %v524 = vpop.f32.mrf.mxu0
        %525 = vdwg.mxu0
        %v526 = vadd.f32 %v275, %v329
        %v527 = vadd.f32 %v278, %v329
        %v528 = vadd.f32 %v281, %v329
        %v529 = vadd.f32 %v284, %v329
        %v530 = vadd.f32 %v287, %v329
        %v531 = vadd.f32 %v290, %v329
        %v532 = vadd.f32 %v293, %v329
        %v533 = vadd.f32 %v296, %v329
        %v534 = vadd.f32 %v299, %v329
        %v535 = vadd.f32 %v302, %v329
        %v536 = vadd.f32 %v305, %v329
        %v537 = vadd.f32 %v308, %v329
        %v538 = vadd.f32 %v311, %v329
        %v539 = vadd.f32 %v314, %v329
        %v540 = vadd.f32 %v317, %v329
        %v541 = vadd.f32 %v320, %v329
        %v542 = vmul.f32 %v448, 2.0
        %v543 = vmul.f32 %v453, 2.0
        %v544 = vmul.f32 %v458, 2.0
        %v545 = vmul.f32 %v463, 2.0
        %v546 = vmul.f32 %v468, 2.0
        %v547 = vmul.f32 %v473, 2.0
        %v548 = vmul.f32 %v478, 2.0
        %v549 = vmul.f32 %v483, 2.0
        %v550 = vmul.f32 %v488, 2.0
        %v551 = vmul.f32 %v493, 2.0
        %v552 = vmul.f32 %v498, 2.0
        %v553 = vmul.f32 %v503, 2.0
        %v554 = vmul.f32 %v508, 2.0
        %v555 = vmul.f32 %v513, 2.0
        %v556 = vmul.f32 %v518, 2.0
        %v557 = vmul.f32 %v523, 2.0
        %v558 = vsub.f32 %v526, %v542
        %v559 = vsub.f32 %v527, %v543
        %v560 = vsub.f32 %v528, %v544
        %v561 = vsub.f32 %v529, %v545
        %v562 = vsub.f32 %v530, %v546
        %v563 = vsub.f32 %v531, %v547
        %v564 = vsub.f32 %v532, %v548
        %v565 = vsub.f32 %v533, %v549
        %v566 = vsub.f32 %v534, %v550
        %v567 = vsub.f32 %v535, %v551
        %v568 = vsub.f32 %v536, %v552
        %v569 = vsub.f32 %v537, %v553
        %v570 = vsub.f32 %v538, %v554
        %v571 = vsub.f32 %v539, %v555
        %v572 = vsub.f32 %v540, %v556
        %v573 = vsub.f32 %v541, %v557
        %574 = vmin.xlane.f32.xlu0 %v558
        %v575 = vpop.xlane.xlu0 %574
        %576 = vmin.xlane.f32.xlu0 %v559
        %v577 = vpop.xlane.xlu0 %576
        %578 = vmin.xlane.f32.xlu0 %v560
        %v579 = vpop.xlane.xlu0 %578
        %580 = vmin.xlane.f32.xlu0 %v561
        %v581 = vpop.xlane.xlu0 %580
        %582 = vmin.xlane.f32.xlu0 %v562
        %v583 = vpop.xlane.xlu0 %582
        %584 = vmin.xlane.f32.xlu0 %v563
        %v585 = vpop.xlane.xlu0 %584
        %586 = vmin.xlane.f32.xlu0 %v564
        %v587 = vpop.xlane.xlu0 %586
        %588 = vmin.xlane.f32.xlu0 %v565
        %v589 = vpop.xlane.xlu0 %588
        %590 = vmin.xlane.f32.xlu0 %v566
        %v591 = vpop.xlane.xlu0 %590
        %592 = vmin.xlane.f32.xlu0 %v567
        %v593 = vpop.xlane.xlu0 %592
        %594 = vmin.xlane.f32.xlu0 %v568
        %v595 = vpop.xlane.xlu0 %594
        %596 = vmin.xlane.f32.xlu0 %v569
        %v597 = vpop.xlane.xlu0 %596
        %598 = vmin.xlane.f32.xlu0 %v570
        %v599 = vpop.xlane.xlu0 %598
        %600 = vmin.xlane.f32.xlu0 %v571
        %v601 = vpop.xlane.xlu0 %600
        %602 = vmin.xlane.f32.xlu0 %v572
        %v603 = vpop.xlane.xlu0 %602
        %604 = vmin.xlane.f32.xlu0 %v573
        %v605 = vpop.xlane.xlu0 %604
        %vm606 = vcmask 7168
        %607 = vst.msk [vmem:[%s237] sm:$0xff] %vm606, %v575
        %608 = vst.msk [vmem:[%s237 + $0x8] sm:$0xff] %vm606, %v577
        %609 = vst.msk [vmem:[%s237 + $0x10] sm:$0xff] %vm606, %v579
        %610 = vst.msk [vmem:[%s237 + $0x18] sm:$0xff] %vm606, %v581
        %611 = vst.msk [vmem:[%s237 + $0x20] sm:$0xff] %vm606, %v583
        %612 = vst.msk [vmem:[%s237 + $0x28] sm:$0xff] %vm606, %v585
        %613 = vst.msk [vmem:[%s237 + $0x30] sm:$0xff] %vm606, %v587
        %614 = vst.msk [vmem:[%s237 + $0x38] sm:$0xff] %vm606, %v589
        %615 = vst.msk [vmem:[%s237 + $0x40] sm:$0xff] %vm606, %v591
        %616 = vst.msk [vmem:[%s237 + $0x48] sm:$0xff] %vm606, %v593
        %617 = vst.msk [vmem:[%s237 + $0x50] sm:$0xff] %vm606, %v595
        %618 = vst.msk [vmem:[%s237 + $0x58] sm:$0xff] %vm606, %v597
        %619 = vst.msk [vmem:[%s237 + $0x60] sm:$0xff] %vm606, %v599
        %620 = vst.msk [vmem:[%s237 + $0x68] sm:$0xff] %vm606, %v601
        %621 = vst.msk [vmem:[%s237 + $0x70] sm:$0xff] %vm606, %v603
        %622 = vst.msk [vmem:[%s237 + $0x78] sm:$0xff] %vm606, %v605
        %v623 = vmin.f32 %v558, %v562
        %v624 = vmin.f32 %v559, %v563
        %v625 = vmin.f32 %v560, %v564
        %v626 = vmin.f32 %v561, %v565
        %v627 = vmin.f32 %v623, %v566
        %v628 = vmin.f32 %v624, %v567
        %v629 = vmin.f32 %v625, %v568
        %v630 = vmin.f32 %v626, %v569
        %v631 = vmin.f32 %v627, %v570
        %v632 = vmin.f32 %v628, %v571
        %v633 = vmin.f32 %v629, %v572
        %v634 = vmin.f32 %v630, %v573
        %v635 = vmin.f32 %v631, %v632
        %v636 = vmin.f32 %v633, %v634
        %v637 = vmin.f32 %v635, %v636
        %v638 = vrot.slane %v637, 4
        %v639 = vmin.f32 %v637, %v638
        %v640 = vrot.slane %v639, 2
        %v641 = vmin.f32 %v639, %v640
        %v642 = vrot.slane %v641, 1
        %v643 = vmin.f32 %v641, %v642
        %644 = vst [vmem:[%s214] sm:$0x1] %v643
        %s645 = smul.u32 16, %s23
        %p646 = scmp.lt.s32.totalorder %s22, 1
        %s647 = scalar_select %p646, %s22, 1
        %p648 = scmp.lt.s32.totalorder %s645, 31
        %s649 = scalar_select %p648, %s645, 31
        %s650 = smul.addr %s647, 32
        %s651 = sadd.s32 %s649, %s650
        %s652 = smul.addr %s651, 8
        %s653 = scalar_lea.vmem %s2, %s652
        %s654 = sand.u32 %s122, 1
        %s655 = scalar_lea.sflag [#allocation3], %s654
        %s656 = sand.u32 %s122, 1
        %s657 = scalar_lea.vmem [#allocation2], %s656
        // Predicated region
        $region29: #{tpu_custom_call.1} parent=27 // pred_check
          %p658 = pneg %p104
        $region30: #{tpu_custom_call.1} parent=27 // pred_check_branch
          %660 = sbr.rel (%p658) target = $region32
        $region31: #{tpu_custom_call.1} parent=27 // pred_region
          %s661 = smul.u32 16, %s23
        $region32: #{tpu_custom_call.1} parent=27 // pred_fallthru
          _
        // Predicated region
        $region33: #{tpu_custom_call.1} parent=27 // pred_check
          %p662 = pneg %p132
        $region34: #{tpu_custom_call.1} parent=27 // pred_check_branch
          %664 = sbr.rel (%p662) target = $region36
        $region35: #{tpu_custom_call.1} parent=27 // pred_region
          %s666 = ssub.s32 16, 16
          %667 = vsyncadd %s655, %s666
          %s668 = smul.addr %s22, 2
          %s669 = sadd.s32 %s23, %s668
          %s670 = smul.addr %s669, 16
          %s671 = scalar_lea.hbm %s3, %s670
          %s673 = sshll.u32 %s657, 4
          %s674 = int_to_ptr.vmem [resolvable:$true] %s673
          %676 = dma.vmem_to_hbm [thread:$0]  %s674, 16, %s671, %s655
        $region36: #{tpu_custom_call.1} parent=27 // pred_fallthru
          _
      $region28: #{tpu_custom_call.1} parent=5 // pred_fallthru
        _
      %p677 = scmp.le.s32.totalorder 2, %s13
      // Predicated region
      $region37: #{tpu_custom_call.1} parent=5 // pred_check
        %p678 = pneg %p677
      $region38: #{tpu_custom_call.1} parent=5 // pred_check_branch
        %680 = sbr.rel (%p678) target = $region40
      $region39: #{tpu_custom_call.1} parent=5 // pred_region
        %s681 = ssub.s32 %s13, 2
        // Predicated region
        $region41: #{tpu_custom_call.1} parent=39 // pred_check
          %p682 = pneg %p110
        $region42: #{tpu_custom_call.1} parent=39 // pred_check_branch
          %684 = sbr.rel (%p682) target = $region44
        $region43: #{tpu_custom_call.1} parent=39 // pred_region
          %s685 = smul.u32 16, %s25
          %p686 = scmp.lt.s32.totalorder %s24, 1
          %s687 = scalar_select %p686, %s24, 1
          %p688 = scmp.lt.s32.totalorder %s685, 31
          %s689 = scalar_select %p688, %s685, 31
          %s690 = smul.addr %s687, 32
          %s691 = sadd.s32 %s689, %s690
          %s692 = smul.addr %s691, 8
          %s693 = scalar_lea.vmem %s2, %s692
        $region44: #{tpu_custom_call.1} parent=39 // pred_fallthru
          _
        // Predicated region
        $region45: #{tpu_custom_call.1} parent=39 // pred_check
          %p694 = pneg %p138
        $region46: #{tpu_custom_call.1} parent=39 // pred_check_branch
          %696 = sbr.rel (%p694) target = $region48
        $region47: #{tpu_custom_call.1} parent=39 // pred_region
          %s697 = sand.u32 %s123, 1
          %s698 = scalar_lea.sflag [#allocation3], %s697
          %s699 = sand.u32 %s123, 1
          %s700 = scalar_lea.vmem [#allocation2], %s699
          %701 = dma.done %s698, 16
        $region48: #{tpu_custom_call.1} parent=39 // pred_fallthru
          _
      $region40: #{tpu_custom_call.1} parent=5 // pred_fallthru
        _
    $region6: #{tpu_custom_call.1} parent=1 // loop_footer
      %s17 = sadd.s32 1, %s13
    $region7: #{tpu_custom_call.1} parent=1 // loop_footer_branch
      %12 = sbr.rel target = $region3
    $region8: #{tpu_custom_call.1} parent=1 // loop_exit
      _
    %702 = vsyncpa [#allocation3], 1
    %s703 = scalar_lea.sflag [#allocation3], 1
    %704 = vsyncpa %s703, 1

</llo_original>
